<compile_context>
chip_gen: v7x
topology: tpu7x:2x2x1
jax: 0.10.0
libtpu: 0.0.40
codegen_flags: <defaults>
</compile_context>

<pallas_src>
import jax
import jax.numpy as jnp
from jax.experimental import pallas as pl
from jax.experimental.pallas import tpu as pltpu


def _visual_gate_kernel(a_ref, q_ref, w_ref, b_ref, g_ref):
    d = a_ref.shape[-1]
    # Two small MXU matmuls against the resident stacked weight [Wa^T ; Wq^T].
    # Static ref slices are free; accumulate in f32.
    acc = jnp.dot(a_ref[...], w_ref[:d, :], preferred_element_type=jnp.float32)
    acc = acc + jnp.dot(q_ref[...], w_ref[d:, :], preferred_element_type=jnp.float32)
    # f32 bias add + sigmoid epilogue (exp goes to the otherwise-idle EUP slot);
    # cast only at the final store.
    g_ref[...] = jax.nn.sigmoid(acc + b_ref[...]).astype(g_ref.dtype)


def prepare_visual_gate_params(w_a, b_a, w_q, b_q):
    """One-time parameter prep (hoisted out of the per-call path).

    w_a, w_q: torch-style nn.Linear weights, shape (out, in) == (D, D).
    b_a, b_q: biases, shape (D,).
    Returns:
      w_stacked: [2D, D] f32, equal to [Wa^T ; Wq^T] stacked along K
                 (so a @ Wa^T + q @ Wq^T == [a||q] @ w_stacked).
      bias:      [1, D] f32, equal to b_a + b_q.
    """
    D = w_a.shape[0]
    w_stacked = jnp.concatenate([w_a.T, w_q.T], axis=0).astype(jnp.float32)
    bias = (b_a.astype(jnp.float32) + b_q.astype(jnp.float32)).reshape(1, D)
    return w_stacked, bias


def _pick_tile_b(B, D, itemsize, vmem_budget_bytes=12 * 1024 * 1024):
    """D-aware batch tile.

    Default is a single grid step (whole batch in one block) — per-grid-step
    overhead dominates tiny gates.  Only tile the batch when the double-buffered
    a/q/g tiles plus the resident stacked weight would exceed a conservative
    VMEM budget (kept well under the 16/32 MiB scoped defaults).
    For truly large D (>~2k) the weight itself should be K/N-tiled and/or given
    pipeline_mode=pl.Buffered(1); not needed at these shapes.
    """
    const_bytes = 2 * (2 * D * D + D) * itemsize          # weight + bias (2 bufs)
    per_row_bytes = 2 * 3 * D * itemsize                  # a, q, g rows (2 bufs each)
    rows_fit = max((vmem_budget_bytes - const_bytes) // per_row_bytes, 8)
    if B <= rows_fit or B % 8 != 0:
        return B                                          # single grid step
    tile = min(B, (rows_fit // 8) * 8)
    while B % tile != 0:
        tile -= 8
    return max(tile, 8)


@jax.jit
def visual_gate(a, q, w_stacked, bias):
    """sigmoid(a @ Wa^T + b_a + q @ Wq^T + b_q), with pre-stacked parameters."""
    B, D = a.shape
    assert w_stacked.shape == (2 * D, D)
    assert bias.shape == (1, D)

    tile_b = _pick_tile_b(B, D, jnp.dtype(a.dtype).itemsize)
    grid = (B // tile_b,)

    return pl.pallas_call(
        _visual_gate_kernel,
        out_shape=jax.ShapeDtypeStruct((B, D), a.dtype),
        grid_spec=pltpu.PrefetchScalarGridSpec(
            num_scalar_prefetch=0,
            grid=grid,
            in_specs=[
                pl.BlockSpec((tile_b, D), lambda i: (i, 0)),   # a
                pl.BlockSpec((tile_b, D), lambda i: (i, 0)),   # q
                pl.BlockSpec((2 * D, D), lambda i: (0, 0)),    # [Wa^T ; Wq^T]
                pl.BlockSpec((1, D), lambda i: (0, 0)),        # b_a + b_q
            ],
            out_specs=pl.BlockSpec((tile_b, D), lambda i: (i, 0)),
        ),
        compiler_params=pltpu.CompilerParams(
            # Note: "parallel" vs "arbitrary" does not change codegen; actual
            # cross-TC sharding would need CORE_PARALLEL and is not worth it at
            # this size, so keep the honest default.
            dimension_semantics=("arbitrary",),
        ),
    )(a, q, w_stacked, bias)


if __name__ == "__main__":
    # params['text_encoder'] == 'lstm' -> output_size = hidden_size
    B = 64       # batch
    D = 32       # hidden_size (output_size)

    key = jax.random.PRNGKey(0)
    k_a, k_q, k_wa, k_ba, k_wq, k_bq = jax.random.split(key, 6)

    a = jax.random.normal(k_a, (B, D), dtype=jnp.float32)
    q = jax.random.normal(k_q, (B, D), dtype=jnp.float32)

    # Torch nn.Linear-style parameters: weight (out, in), bias (out,).
    scale = 1.0 / jnp.sqrt(D)
    w_a = jax.random.uniform(k_wa, (D, D), minval=-scale, maxval=scale, dtype=jnp.float32)
    b_a = jax.random.uniform(k_ba, (D,), minval=-scale, maxval=scale, dtype=jnp.float32)
    w_q = jax.random.uniform(k_wq, (D, D), minval=-scale, maxval=scale, dtype=jnp.float32)
    b_q = jax.random.uniform(k_bq, (D,), minval=-scale, maxval=scale, dtype=jnp.float32)

    # One-time parameter preparation (hoisted out of the per-call path).
    w_stacked, bias = prepare_visual_gate_params(w_a, b_a, w_q, b_q)

    g = visual_gate(a, q, w_stacked, bias)
    jax.block_until_ready(g)

    # Reference (mirrors torch semantics). Everything is f32 now, so the
    # tolerance only has to cover MXU default-precision matmul passes.
    ref = jax.nn.sigmoid(a @ w_a.T + b_a + q @ w_q.T + b_q)
    assert jnp.allclose(g, ref, atol=5e-3, rtol=5e-3), float(jnp.max(jnp.abs(g - ref)))

    print("KERNEL_OK")
</pallas_src>

<mosaic_0001>
module attributes {stable_mosaic.version = 11 : i64} {
  func.func @_visual_gate_kernel(%arg0: i32, %arg1: memref<64x32xf32, #tpu.memory_space<vmem>>, %arg2: memref<64x32xf32, #tpu.memory_space<vmem>>, %arg3: memref<64x32xf32, #tpu.memory_space<vmem>>, %arg4: memref<1x32xf32, #tpu.memory_space<vmem>>, %arg5: memref<64x32xf32, #tpu.memory_space<vmem>>) attributes {dimension_semantics = [#tpu.dimension_semantics<arbitrary>], iteration_bounds = array<i64: 1>, scalar_prefetch = 0 : i64, scratch_operands = 0 : i64, tpu.core_type = #tpu.core_type<tc>, window_params = [{transform_indices = @transform_0, window_bounds = array<i64: 64, 32>}, {transform_indices = @transform_1, window_bounds = array<i64: 64, 32>}, {pipeline_mode = #tpu.pipeline_mode<synchronous>, transform_indices = @transform_2, window_bounds = array<i64: 64, 32>}, {pipeline_mode = #tpu.pipeline_mode<synchronous>, transform_indices = @transform_3, window_bounds = array<i64: 1, 32>}, {transform_indices = @transform_4, window_bounds = array<i64: 64, 32>}]} {
    %c0 = arith.constant 0 : index
    %c0_0 = arith.constant 0 : index
    %0 = vector.load %arg1[%c0, %c0_0] : memref<64x32xf32, #tpu.memory_space<vmem>>, vector<64x32xf32>
    %c0_1 = arith.constant 0 : index
    %c0_2 = arith.constant 0 : index
    %1 = vector.load %arg3[%c0_1, %c0_2] : memref<64x32xf32, #tpu.memory_space<vmem>>, vector<32x32xf32>
    %cst = arith.constant dense<0.000000e+00> : vector<64x32xf32>
    %2 = tpu.matmul %0, %1, %cst {dimension_numbers = #tpu.dot_dimension_numbers<[1], [0], [0], [1], [0, 0, 1, 1], [], []>} : vector<64x32xf32>, vector<32x32xf32>, vector<64x32xf32> -> vector<64x32xf32>
    %c0_3 = arith.constant 0 : index
    %c0_4 = arith.constant 0 : index
    %3 = vector.load %arg2[%c0_3, %c0_4] : memref<64x32xf32, #tpu.memory_space<vmem>>, vector<64x32xf32>
    %c32 = arith.constant 32 : index
    %c0_5 = arith.constant 0 : index
    %4 = vector.load %arg3[%c32, %c0_5] : memref<64x32xf32, #tpu.memory_space<vmem>>, vector<32x32xf32>
    %cst_6 = arith.constant dense<0.000000e+00> : vector<64x32xf32>
    %5 = tpu.matmul %3, %4, %cst_6 {dimension_numbers = #tpu.dot_dimension_numbers<[1], [0], [0], [1], [0, 0, 1, 1], [], []>} : vector<64x32xf32>, vector<32x32xf32>, vector<64x32xf32> -> vector<64x32xf32>
    %6 = arith.addf %2, %5 : vector<64x32xf32>
    %c0_7 = arith.constant 0 : index
    %c0_8 = arith.constant 0 : index
    %7 = vector.load %arg4[%c0_7, %c0_8] : memref<1x32xf32, #tpu.memory_space<vmem>>, vector<1x32xf32>
    %8 = vector.broadcast %7 : vector<1x32xf32> to vector<64x32xf32>
    %9 = arith.addf %6, %8 : vector<64x32xf32>
    %10 = arith.negf %9 : vector<64x32xf32>
    %11 = math.exp %10 : vector<64x32xf32>
    %cst_9 = arith.constant 1.000000e+00 : f32
    %12 = vector.broadcast %cst_9 : f32 to vector<64x32xf32>
    %13 = arith.addf %12, %11 : vector<64x32xf32>
    %14 = arith.divf %12, %13 : vector<64x32xf32>
    %c0_10 = arith.constant 0 : index
    %c0_11 = arith.constant 0 : index
    %15 = vector.load %arg5[%c0_10, %c0_11] : memref<64x32xf32, #tpu.memory_space<vmem>>, vector<64x32xf32>
    tpu.vector_store %arg5[%c0_10, %c0_11], %14 {strides = array<i32>} : memref<64x32xf32, #tpu.memory_space<vmem>>, vector<64x32xf32>,
    return
  }
  func.func @transform_0(%arg0: i32) -> (i32, i32) {
    %c0_i32 = arith.constant 0 : i32
    %c0_i32_0 = arith.constant 0 : i32
    return %arg0, %c0_i32 : i32, i32
  }
  func.func @transform_1(%arg0: i32) -> (i32, i32) {
    %c0_i32 = arith.constant 0 : i32
    %c0_i32_0 = arith.constant 0 : i32
    return %arg0, %c0_i32 : i32, i32
  }
  func.func @transform_2(%arg0: i32) -> (i32, i32) {
    %c0_i32 = arith.constant 0 : i32
    %c0_i32_0 = arith.constant 0 : i32
    %c0_i32_1 = arith.constant 0 : i32
    return %c0_i32, %c0_i32_0 : i32, i32
  }
  func.func @transform_3(%arg0: i32) -> (i32, i32) {
    %c0_i32 = arith.constant 0 : i32
    %c0_i32_0 = arith.constant 0 : i32
    %c0_i32_1 = arith.constant 0 : i32
    return %c0_i32, %c0_i32_0 : i32, i32
  }
  func.func @transform_4(%arg0: i32) -> (i32, i32) {
    %c0_i32 = arith.constant 0 : i32
    %c0_i32_0 = arith.constant 0 : i32
    return %arg0, %c0_i32 : i32, i32
  }
}

</mosaic_0001>

<llo_original>
// kernel: visual_gate.1
$region0: #{visual_gate.1}
  #allocation0 [shape = 'u32[]', space=smem, size = 0x4, offset = 0x4, fixed_abs, tag = 'smem constant byte address 0x4 - core index']
  #allocation1 [shape = 'u32[144,128]{1,0:T(1,128)}', space=vmem, size = 0x12000, scoped, tag = 'internal scratch']
  %s0 = inlined_call_operand.vmem [shape: f32[64,32], index: 0, kind: input, shape index: {}]
  %s1 = inlined_call_operand.vmem [shape: f32[64,32], index: 1, kind: input, shape index: {}]
  %s2 = inlined_call_operand.vmem [shape: f32[64,32], index: 2, kind: input, shape index: {}]
  %s3 = inlined_call_operand.vmem [shape: f32[1,32], index: 3, kind: input, shape index: {}]
  %s4 = inlined_call_operand.vmem [shape: f32[64,32], index: 4, kind: output, shape index: {}]
  %s5 = sld [smem:[#allocation0]]
  $region26: #{visual_gate.1} parent=0
    _
  %s7 = ssub.s32 1, %s5
  %s8 = scalar_select 0, %s7, %s5
  // Predicated region
  $region2: #{visual_gate.1} parent=0 // pred_check
    _
  $region3: #{visual_gate.1} parent=0 // pred_check_branch
    %10 = sbr.rel (0) target = $region5
  $region4: #{visual_gate.1} parent=0 // pred_region
    _
  $region5: #{visual_gate.1} parent=0 // pred_fallthru
    _
  // Predicated region
  $region6: #{visual_gate.1} parent=0 // pred_check
    _
  $region7: #{visual_gate.1} parent=0 // pred_check_branch
    %12 = sbr.rel (0) target = $region9
  $region8: #{visual_gate.1} parent=0 // pred_region
    _
  $region9: #{visual_gate.1} parent=0 // pred_fallthru
    _
  // Predicated region
  $region10: #{visual_gate.1} parent=0 // pred_check
    _
  $region11: #{visual_gate.1} parent=0 // pred_check_branch
    %14 = sbr.rel (0) target = $region13
  $region12: #{visual_gate.1} parent=0 // pred_region
    _
  $region13: #{visual_gate.1} parent=0 // pred_fallthru
    _
  // Predicated region
  $region14: #{visual_gate.1} parent=0 // pred_check
    _
  $region15: #{visual_gate.1} parent=0 // pred_check_branch
    %16 = sbr.rel (0) target = $region17
  $region16: #{visual_gate.1} parent=0 // pred_region
    _
  $region17: #{visual_gate.1} parent=0 // pred_fallthru
    _
  %v17 = vld [vmem:[%s0] sm:$0xff]
  %v18 = vld [vmem:[%s0 + $0x8] sm:$0xff]
  %v19 = vld [vmem:[%s0 + $0x10] sm:$0xff]
  %v20 = vld [vmem:[%s0 + $0x18] sm:$0xff]
  %v21 = vld [vmem:[%s0 + $0x20] sm:$0xff]
  %v22 = vld [vmem:[%s0 + $0x28] sm:$0xff]
  %v23 = vld [vmem:[%s0 + $0x30] sm:$0xff]
  %v24 = vld [vmem:[%s0 + $0x38] sm:$0xff]
  %v25 = vld [vmem:[%s2] sm:$0xff]
  %v26 = vld [vmem:[%s2 + $0x8] sm:$0xff]
  %v27 = vld [vmem:[%s2 + $0x10] sm:$0xff]
  %v28 = vld [vmem:[%s2 + $0x18] sm:$0xff]
  %v29 = vld [vmem:[%s1] sm:$0xff]
  %v30 = vld [vmem:[%s1 + $0x8] sm:$0xff]
  %v31 = vld [vmem:[%s1 + $0x10] sm:$0xff]
  %v32 = vld [vmem:[%s1 + $0x18] sm:$0xff]
  %v33 = vld [vmem:[%s1 + $0x20] sm:$0xff]
  %v34 = vld [vmem:[%s1 + $0x28] sm:$0xff]
  %v35 = vld [vmem:[%s1 + $0x30] sm:$0xff]
  %v36 = vld [vmem:[%s1 + $0x38] sm:$0xff]
  %v37 = vld [vmem:[%s2 + $0x20] sm:$0xff]
  %v38 = vld [vmem:[%s2 + $0x28] sm:$0xff]
  %v39 = vld [vmem:[%s2 + $0x30] sm:$0xff]
  %v40 = vld [vmem:[%s2 + $0x38] sm:$0xff]
  %vm41 = vcmask 261120
  %v43 = vsel %vm41, %v29, 0
  %v46 = vsel %vm41, %v30, 0
  %v49 = vsel %vm41, %v31, 0
  %v52 = vsel %vm41, %v32, 0
  %v55 = vsel %vm41, %v33, 0
  %v58 = vsel %vm41, %v34, 0
  %v61 = vsel %vm41, %v35, 0
  %v64 = vsel %vm41, %v36, 0
  %66 = vmatprep.subr.mxu0 0.0
  %67 = vmatpush1.msra.mxu0 %v37
  %68 = vmatprep.subr.mxu0 0.0
  %69 = vmatpush1.msra.mxu0 %v38
  %70 = vmatprep.subr.mxu0 0.0
  %71 = vmatpush1.msra.mxu0 %v39
  %72 = vmatprep.subr.mxu0 0.0
  %73 = vmatpush1.msra.mxu0 %v40
  %74 = vmatprep.subr.mxu0 0.0
  %75 = vmatpush1.msra.mxu0 0.0
  %76 = vmatprep.subr.mxu0 0.0
  %77 = vmatpush1.msra.mxu0 0.0
  %78 = vmatprep.subr.mxu0 0.0
  %79 = vmatpush1.msra.mxu0 0.0
  %80 = vmatprep.subr.mxu0 0.0
  %81 = vmatpush1.msra.mxu0 0.0
  %82 = vmatprep.subr.mxu0 0.0
  %83 = vmatpush1.msra.mxu0 0.0
  %84 = vmatprep.subr.mxu0 0.0
  %85 = vmatpush1.msra.mxu0 0.0
  %86 = vmatprep.subr.mxu0 0.0
  %87 = vmatpush1.msra.mxu0 0.0
  %88 = vmatprep.subr.mxu0 0.0
  %89 = vmatpush1.msra.mxu0 0.0
  %90 = vmatprep.subr.mxu0 0.0
  %91 = vmatpush1.msra.mxu0 0.0
  %92 = vmatprep.subr.mxu0 0.0
  %93 = vmatpush1.msra.mxu0 0.0
  %94 = vmatprep.subr.mxu0 0.0
  %95 = vmatpush1.msra.mxu0 0.0
  %96 = vmatprep.subr.mxu0 0.0
  %97 = vmatpush1.msra.mxu0 0.0
  %98 = vmatprep.subr.mxu0 0.0
  %99 = vmatpush1.msra.mxu0 0.0
  %100 = vmatprep.subr.mxu0 0.0
  %101 = vmatpush1.msra.mxu0 0.0
  %102 = vmatprep.subr.mxu0 0.0
  %103 = vmatpush1.msra.mxu0 0.0
  %104 = vmatprep.subr.mxu0 0.0
  %105 = vmatpush1.msra.mxu0 0.0
  %106 = vmatprep.subr.mxu0 0.0
  %107 = vmatpush1.msra.mxu0 0.0
  %108 = vmatprep.subr.mxu0 0.0
  %109 = vmatpush1.msra.mxu0 0.0
  %110 = vmatprep.subr.mxu0 0.0
  %111 = vmatpush1.msra.mxu0 0.0
  %112 = vmatprep.subr.mxu0 0.0
  %113 = vmatpush1.msra.mxu0 0.0
  %114 = vmatprep.subr.mxu0 0.0
  %115 = vmatpush1.msra.mxu0 0.0
  %116 = vmatprep.subr.mxu0 0.0
  %117 = vmatpush1.msra.mxu0 0.0
  %118 = vmatprep.subr.mxu0 0.0
  %119 = vmatpush1.msra.mxu0 0.0
  %120 = vmatprep.subr.mxu0 0.0
  %121 = vmatpush1.msra.mxu0 0.0
  %122 = vmatprep.subr.mxu0 0.0
  %123 = vmatpush1.msra.mxu0 0.0
  %124 = vmatprep.subr.mxu0 0.0
  %125 = vmatpush1.msra.mxu0 0.0
  %126 = vmatprep.subr.mxu0 0.0
  %127 = vmatpush1.msra.mxu0 0.0
  %128 = vmatprep.subr.mxu0 0.0
  %129 = vmatpush1.msra.mxu0 0.0
  %130 = vmatprep.mubr.f32.mxu0 0.0
  %131 = vmatmul.mubr.f32.gmra.mrb[0].mxu0 %v43
  %v132 = vpop.f32.mrb[0].mxu0
  %v133 = vadd.f32 0.0, %v132
  %v134 = vpop.f32.mrb[0].mxu0
  %135 = vmatprep.mubr.f32.mxu0 0.0
  %136 = vmatmul.mubr.f32.gmra.mrb[0].mxu0 %v46
  %v137 = vpop.f32.mrb[0].mxu0
  %v138 = vadd.f32 0.0, %v137
  %v139 = vpop.f32.mrb[0].mxu0
  %140 = vmatprep.mubr.f32.mxu0 0.0
  %141 = vmatmul.mubr.f32.gmra.mrb[0].mxu0 %v49
  %v142 = vpop.f32.mrb[0].mxu0
  %v143 = vadd.f32 0.0, %v142
  %v144 = vpop.f32.mrb[0].mxu0
  %145 = vmatprep.mubr.f32.mxu0 0.0
  %146 = vmatmul.mubr.f32.gmra.mrb[0].mxu0 %v52
  %v147 = vpop.f32.mrb[0].mxu0
  %v148 = vadd.f32 0.0, %v147
  %v149 = vpop.f32.mrb[0].mxu0
  %150 = vmatprep.mubr.f32.mxu0 0.0
  %151 = vmatmul.mubr.f32.gmra.mrb[0].mxu0 %v55
  %v152 = vpop.f32.mrb[0].mxu0
  %v153 = vadd.f32 0.0, %v152
  %v154 = vpop.f32.mrb[0].mxu0
  %155 = vmatprep.mubr.f32.mxu0 0.0
  %156 = vmatmul.mubr.f32.gmra.mrb[0].mxu0 %v58
  %v157 = vpop.f32.mrb[0].mxu0
  %v158 = vadd.f32 0.0, %v157
  %v159 = vpop.f32.mrb[0].mxu0
  %160 = vmatprep.mubr.f32.mxu0 0.0
  %161 = vmatmul.mubr.f32.gmra.mrb[0].mxu0 %v61
  %v162 = vpop.f32.mrb[0].mxu0
  %v163 = vadd.f32 0.0, %v162
  %v164 = vpop.f32.mrb[0].mxu0
  %165 = vmatprep.mubr.f32.mxu0 0.0
  %166 = vmatmul.mubr.f32.gmra.mrb[0].mxu0 %v64
  %v167 = vpop.f32.mrb[0].mxu0
  %v168 = vadd.f32 0.0, %v167
  %v169 = vpop.f32.mrb[0].mxu0
  %170 = vdwg.mxu0
  %v172 = vsel %vm41, %v17, 0
  %v175 = vsel %vm41, %v18, 0
  %v178 = vsel %vm41, %v19, 0
  %v181 = vsel %vm41, %v20, 0
  %v184 = vsel %vm41, %v21, 0
  %v187 = vsel %vm41, %v22, 0
  %v190 = vsel %vm41, %v23, 0
  %v193 = vsel %vm41, %v24, 0
  %195 = vmatprep.subr.mxu0 0.0
  %196 = vmatpush1.msra.mxu0 %v25
  %197 = vmatprep.subr.mxu0 0.0
  %198 = vmatpush1.msra.mxu0 %v26
  %199 = vmatprep.subr.mxu0 0.0
  %200 = vmatpush1.msra.mxu0 %v27
  %201 = vmatprep.subr.mxu0 0.0
  %202 = vmatpush1.msra.mxu0 %v28
  %203 = vmatprep.subr.mxu0 0.0
  %204 = vmatpush1.msra.mxu0 0.0
  %205 = vmatprep.subr.mxu0 0.0
  %206 = vmatpush1.msra.mxu0 0.0
  %207 = vmatprep.subr.mxu0 0.0
  %208 = vmatpush1.msra.mxu0 0.0
  %209 = vmatprep.subr.mxu0 0.0
  %210 = vmatpush1.msra.mxu0 0.0
  %211 = vmatprep.subr.mxu0 0.0
  %212 = vmatpush1.msra.mxu0 0.0
  %213 = vmatprep.subr.mxu0 0.0
  %214 = vmatpush1.msra.mxu0 0.0
  %215 = vmatprep.subr.mxu0 0.0
  %216 = vmatpush1.msra.mxu0 0.0
  %217 = vmatprep.subr.mxu0 0.0
  %218 = vmatpush1.msra.mxu0 0.0
  %219 = vmatprep.subr.mxu0 0.0
  %220 = vmatpush1.msra.mxu0 0.0
  %221 = vmatprep.subr.mxu0 0.0
  %222 = vmatpush1.msra.mxu0 0.0
  %223 = vmatprep.subr.mxu0 0.0
  %224 = vmatpush1.msra.mxu0 0.0
  %225 = vmatprep.subr.mxu0 0.0
  %226 = vmatpush1.msra.mxu0 0.0
  %227 = vmatprep.subr.mxu0 0.0
  %228 = vmatpush1.msra.mxu0 0.0
  %229 = vmatprep.subr.mxu0 0.0
  %230 = vmatpush1.msra.mxu0 0.0
  %231 = vmatprep.subr.mxu0 0.0
  %232 = vmatpush1.msra.mxu0 0.0
  %233 = vmatprep.subr.mxu0 0.0
  %234 = vmatpush1.msra.mxu0 0.0
  %235 = vmatprep.subr.mxu0 0.0
  %236 = vmatpush1.msra.mxu0 0.0
  %237 = vmatprep.subr.mxu0 0.0
  %238 = vmatpush1.msra.mxu0 0.0
  %239 = vmatprep.subr.mxu0 0.0
  %240 = vmatpush1.msra.mxu0 0.0
  %241 = vmatprep.subr.mxu0 0.0
  %242 = vmatpush1.msra.mxu0 0.0
  %243 = vmatprep.subr.mxu0 0.0
  %244 = vmatpush1.msra.mxu0 0.0
  %245 = vmatprep.subr.mxu0 0.0
  %246 = vmatpush1.msra.mxu0 0.0
  %247 = vmatprep.subr.mxu0 0.0
  %248 = vmatpush1.msra.mxu0 0.0
  %249 = vmatprep.subr.mxu0 0.0
  %250 = vmatpush1.msra.mxu0 0.0
  %251 = vmatprep.subr.mxu0 0.0
  %252 = vmatpush1.msra.mxu0 0.0
  %253 = vmatprep.subr.mxu0 0.0
  %254 = vmatpush1.msra.mxu0 0.0
  %255 = vmatprep.subr.mxu0 0.0
  %256 = vmatpush1.msra.mxu0 0.0
  %257 = vmatprep.subr.mxu0 0.0
  %258 = vmatpush1.msra.mxu0 0.0
  %259 = vmatprep.mubr.f32.mxu0 0.0
  %260 = vmatmul.mubr.f32.gmra.mrb[0].mxu0 %v172
  %v261 = vpop.f32.mrb[0].mxu0
  %v262 = vadd.f32 %v133, %v261
  %v263 = vpop.f32.mrb[0].mxu0
  %264 = vmatprep.mubr.f32.mxu0 0.0
  %265 = vmatmul.mubr.f32.gmra.mrb[0].mxu0 %v175
  %v266 = vpop.f32.mrb[0].mxu0
  %v267 = vadd.f32 %v138, %v266
  %v268 = vpop.f32.mrb[0].mxu0
  %269 = vmatprep.mubr.f32.mxu0 0.0
  %270 = vmatmul.mubr.f32.gmra.mrb[0].mxu0 %v178
  %v271 = vpop.f32.mrb[0].mxu0
  %v272 = vadd.f32 %v143, %v271
  %v273 = vpop.f32.mrb[0].mxu0
  %274 = vmatprep.mubr.f32.mxu0 0.0
  %275 = vmatmul.mubr.f32.gmra.mrb[0].mxu0 %v181
  %v276 = vpop.f32.mrb[0].mxu0
  %v277 = vadd.f32 %v148, %v276
  %v278 = vpop.f32.mrb[0].mxu0
  %279 = vmatprep.mubr.f32.mxu0 0.0
  %280 = vmatmul.mubr.f32.gmra.mrb[0].mxu0 %v184
  %v281 = vpop.f32.mrb[0].mxu0
  %v282 = vadd.f32 %v153, %v281
  %v283 = vpop.f32.mrb[0].mxu0
  %284 = vmatprep.mubr.f32.mxu0 0.0
  %285 = vmatmul.mubr.f32.gmra.mrb[0].mxu0 %v187
  %v286 = vpop.f32.mrb[0].mxu0
  %v287 = vadd.f32 %v158, %v286
  %v288 = vpop.f32.mrb[0].mxu0
  %289 = vmatprep.mubr.f32.mxu0 0.0
  %290 = vmatmul.mubr.f32.gmra.mrb[0].mxu0 %v190
  %v291 = vpop.f32.mrb[0].mxu0
  %v292 = vadd.f32 %v163, %v291
  %v293 = vpop.f32.mrb[0].mxu0
  %294 = vmatprep.mubr.f32.mxu0 0.0
  %295 = vmatmul.mubr.f32.gmra.mrb[0].mxu0 %v193
  %v296 = vpop.f32.mrb[0].mxu0
  %v297 = vadd.f32 %v168, %v296
  %v298 = vpop.f32.mrb[0].mxu0
  %299 = vdwg.mxu0
  %v300 = vld [vmem:[%s3] sm:$0x1]
  %v302 = vlaneseq
  %v303 = vshrl.u32 %v302, 7
  %v304 = vsub.s32 0, %v303
  %v305 = vrot.slane %v300, %v304
  %v307 = vadd.f32 %v262, %v305
  %v308 = vadd.f32 %v267, %v305
  %v309 = vadd.f32 %v272, %v305
  %v310 = vadd.f32 %v277, %v305
  %v311 = vadd.f32 %v282, %v305
  %v312 = vadd.f32 %v287, %v305
  %v313 = vadd.f32 %v292, %v305
  %v314 = vadd.f32 %v297, %v305
  %v315 = vxor.u32 %v307, 2147483648
  %v316 = vxor.u32 %v308, 2147483648
  %v317 = vxor.u32 %v309, 2147483648
  %v318 = vxor.u32 %v310, 2147483648
  %v319 = vxor.u32 %v311, 2147483648
  %v320 = vxor.u32 %v312, 2147483648
  %v321 = vxor.u32 %v313, 2147483648
  %v322 = vxor.u32 %v314, 2147483648
  %v323 = vmul.f32 %v315, 1.442695
  %v324 = vpow.pop %v323
  %v325 = vmul.f32 %v316, 1.442695
  %v326 = vpow.pop %v325
  %v327 = vmul.f32 %v317, 1.442695
  %v328 = vpow.pop %v327
  %v329 = vmul.f32 %v318, 1.442695
  %v330 = vpow.pop %v329
  %v331 = vmul.f32 %v319, 1.442695
  %v332 = vpow.pop %v331
  %v333 = vmul.f32 %v320, 1.442695
  %v334 = vpow.pop %v333
  %v335 = vmul.f32 %v321, 1.442695
  %v336 = vpow.pop %v335
  %v337 = vmul.f32 %v322, 1.442695
  %v338 = vpow.pop %v337
  %v339 = vadd.f32 %v324, 1.0
  %v340 = vadd.f32 %v326, 1.0
  %v341 = vadd.f32 %v328, 1.0
  %v342 = vadd.f32 %v330, 1.0
  %v343 = vadd.f32 %v332, 1.0
  %v344 = vadd.f32 %v334, 1.0
  %v345 = vadd.f32 %v336, 1.0
  %v346 = vadd.f32 %v338, 1.0
  %v347 = vrcp.pop %v339
  %v348 = vmul.f32 1.0, %v347
  %v349 = vrcp.pop %v340
  %v350 = vmul.f32 1.0, %v349
  %v351 = vrcp.pop %v341
  %v352 = vmul.f32 1.0, %v351
  %v353 = vrcp.pop %v342
  %v354 = vmul.f32 1.0, %v353
  %v355 = vrcp.pop %v343
  %v356 = vmul.f32 1.0, %v355
  %v357 = vrcp.pop %v344
  %v358 = vmul.f32 1.0, %v357
  %v359 = vrcp.pop %v345
  %v360 = vmul.f32 1.0, %v359
  %v361 = vrcp.pop %v346
  %v362 = vmul.f32 1.0, %v361
  %363 = vst.msk [vmem:[%s4] sm:$0xff] %vm41, %v348
  %364 = vst.msk [vmem:[%s4 + $0x8] sm:$0xff] %vm41, %v350
  %365 = vst.msk [vmem:[%s4 + $0x10] sm:$0xff] %vm41, %v352
  %366 = vst.msk [vmem:[%s4 + $0x18] sm:$0xff] %vm41, %v354
  %367 = vst.msk [vmem:[%s4 + $0x20] sm:$0xff] %vm41, %v356
  %368 = vst.msk [vmem:[%s4 + $0x28] sm:$0xff] %vm41, %v358
  %369 = vst.msk [vmem:[%s4 + $0x30] sm:$0xff] %vm41, %v360
  %370 = vst.msk [vmem:[%s4 + $0x38] sm:$0xff] %vm41, %v362
  // Predicated region
  $region18: #{visual_gate.1} parent=0 // pred_check
    _
  $region19: #{visual_gate.1} parent=0 // pred_check_branch
    %372 = sbr.rel (0) target = $region21
  $region20: #{visual_gate.1} parent=0 // pred_region
    _
  $region21: #{visual_gate.1} parent=0 // pred_fallthru
    _
  // Predicated region
  $region22: #{visual_gate.1} parent=0 // pred_check
    _
  $region23: #{visual_gate.1} parent=0 // pred_check_branch
    %374 = sbr.rel (0) target = $region25
  $region24: #{visual_gate.1} parent=0 // pred_region
    _
  $region25: #{visual_gate.1} parent=0 // pred_fallthru
    _

</llo_original>
